<compile_context>
chip_gen: v7x
topology: tpu7x:2x2x1
jax: 0.10.0
libtpu: 0.0.40
codegen_flags: <defaults>
</compile_context>

<pallas_src>
import math

import jax
import jax.numpy as jnp
from jax.experimental import pallas as pl
from jax.experimental.pallas import tpu as pltpu


def _round_up(x, m):
    return ((x + m - 1) // m) * m


def _pick_tile(dim, target, align):
    """Largest divisor of `dim` that is <= target and a multiple of `align`.

    Assumes `dim` is already a multiple of `align`.
    """
    t = min(dim, max(target, align))
    while t > align and dim % t != 0:
        t -= align
    return t


# ---------------------------------------------------------------------------
# Kernel 1: gate the weights once:  W = tanh(W_hat) * sigmoid(M_hat)
# Inputs are already transposed to (in_dim, out_dim) in the wrapper.
# ---------------------------------------------------------------------------
def _gate_kernel(w_hat_ref, m_hat_ref, w_ref):
    # Gating in f32 (EUP transcendentals), single cast at the store.
    w = jnp.tanh(w_hat_ref[...]) * jax.nn.sigmoid(m_hat_ref[...])
    w_ref[...] = w.astype(w_ref.dtype)


def _gate_weights(w_hat_t, m_hat_t, *, out_dtype):
    K, N = w_hat_t.shape  # (in_pad, out_pad), both multiples of 128
    tk = _pick_tile(K, 512, 8)
    tn = _pick_tile(N, 512, 128)
    grid = (K // tk, N // tn)
    return pl.pallas_call(
        _gate_kernel,
        out_shape=jax.ShapeDtypeStruct((K, N), out_dtype),
        grid_spec=pl.GridSpec(
            grid=grid,
            in_specs=[
                pl.BlockSpec((tk, tn), lambda i, j: (i, j)),
                pl.BlockSpec((tk, tn), lambda i, j: (i, j)),
            ],
            out_specs=pl.BlockSpec((tk, tn), lambda i, j: (i, j)),
        ),
        compiler_params=pltpu.CompilerParams(
            dimension_semantics=("parallel", "parallel"),
            vmem_limit_bytes=32 * 1024 * 1024,
        ),
        cost_estimate=pl.CostEstimate(
            flops=K * N,
            transcendentals=2 * K * N,
            bytes_accessed=3 * K * N * 4,
        ),
    )(w_hat_t, m_hat_t)


# ---------------------------------------------------------------------------
# Kernel 2: tiled matmul  y = x @ W  with f32 VMEM accumulator.
# ---------------------------------------------------------------------------
def _matmul_kernel(x_ref, w_ref, o_ref, acc_ref):
    @pl.when(pl.program_id(2) == 0)
    def _():
        acc_ref[...] = jnp.zeros_like(acc_ref)

    acc_ref[...] += jnp.dot(
        x_ref[...], w_ref[...], preferred_element_type=jnp.float32
    )

    @pl.when(pl.program_id(2) == pl.num_programs(2) - 1)
    def _():
        o_ref[...] = acc_ref[...].astype(o_ref.dtype)


def _matmul(x, w, *, out_dtype):
    M, K = x.shape
    K2, N = w.shape
    assert K == K2
    tm = _pick_tile(M, 256, 8)
    tn = _pick_tile(N, 256, 128)
    tk = _pick_tile(K, 512, 128)
    grid = (M // tm, N // tn, K // tk)  # reduction (k) axis last
    bytes_per_elem = jnp.dtype(x.dtype).itemsize
    return pl.pallas_call(
        _matmul_kernel,
        out_shape=jax.ShapeDtypeStruct((M, N), out_dtype),
        grid_spec=pltpu.PrefetchScalarGridSpec(
            num_scalar_prefetch=0,
            grid=grid,
            in_specs=[
                pl.BlockSpec((tm, tk), lambda i, j, k: (i, k)),
                pl.BlockSpec((tk, tn), lambda i, j, k: (k, j)),
            ],
            out_specs=pl.BlockSpec((tm, tn), lambda i, j, k: (i, j)),
            scratch_shapes=[pltpu.VMEM((tm, tn), jnp.float32)],
        ),
        compiler_params=pltpu.CompilerParams(
            # batch / out_dim tiles shard across both TCs on v7x; harmless on
            # single-TC v5e/v6e.
            dimension_semantics=("parallel", "parallel", "arbitrary"),
            # Sized against v7x's 32 MiB scoped VMEM (tiles use ~3 MiB total).
            vmem_limit_bytes=32 * 1024 * 1024,
        ),
        cost_estimate=pl.CostEstimate(
            flops=2 * M * N * K,
            transcendentals=0,
            bytes_accessed=(M * K + K * N) * bytes_per_elem + M * N * 4,
        ),
    )(x, w)


# ---------------------------------------------------------------------------
# Public wrapper: PyTorch-layout NAC forward.
# ---------------------------------------------------------------------------
def nac_forward(x, w_hat, m_hat, *, mxu_dtype=None):
    """NAC forward: y = x @ (tanh(W_hat) * sigmoid(M_hat)).T

    x:            (batch, in_dim)
    w_hat, m_hat: (out_dim, in_dim)   (PyTorch layout)
    mxu_dtype:    optional dtype (e.g. jnp.bfloat16) for the MXU operands;
                  gating stays f32, accumulation stays f32.
    returns:      (batch, out_dim) in x.dtype
    """
    B, K = x.shape
    N, K2 = w_hat.shape
    assert K == K2 and m_hat.shape == (N, K)
    out_dtype = x.dtype

    # Lane/sublane alignment: in/out dims -> multiples of 128, batch -> 8.
    M_pad = _round_up(B, 8)
    K_pad = _round_up(K, 128)
    N_pad = _round_up(N, 128)

    # Pre-transpose weights to (in_dim, out_dim) in the wrapper (layout
    # plumbing) so the kernel never transposes. Zero padding is exact:
    # tanh(0)*sigmoid(0) == 0 -> padded rows/cols contribute nothing.
    w_hat_t = jnp.pad(w_hat.T, ((0, K_pad - K), (0, N_pad - N)))
    m_hat_t = jnp.pad(m_hat.T, ((0, K_pad - K), (0, N_pad - N)))
    x_pad = jnp.pad(x, ((0, M_pad - B), (0, K_pad - K)))

    w_dtype = jnp.float32 if mxu_dtype is None else mxu_dtype
    w = _gate_weights(w_hat_t, m_hat_t, out_dtype=w_dtype)
    if mxu_dtype is not None:
        x_pad = x_pad.astype(mxu_dtype)

    y_pad = _matmul(x_pad, w, out_dtype=out_dtype)
    return y_pad[:B, :N]


def kaiming_uniform(key, shape, dtype=jnp.float32):
    # Matches torch.nn.init.kaiming_uniform_ defaults (a=0 -> gain=sqrt(2),
    # fan_in = shape[1] for a 2D weight).
    fan_in = shape[1]
    gain = math.sqrt(2.0)
    bound = gain * math.sqrt(3.0 / fan_in)
    return jax.random.uniform(key, shape, dtype, minval=-bound, maxval=bound)


if __name__ == "__main__":
    in_dim, out_dim, batch = 32, 16, 8

    key = jax.random.PRNGKey(0)
    k_x, k_w, k_m = jax.random.split(key, 3)

    x = jax.random.normal(k_x, (batch, in_dim), dtype=jnp.float32)
    w_hat = kaiming_uniform(k_w, (out_dim, in_dim))
    m_hat = kaiming_uniform(k_m, (out_dim, in_dim))

    y = nac_forward(x, w_hat, m_hat)
    y = jax.block_until_ready(y)

    # Pure-JAX reference check.
    w_ref = jnp.tanh(w_hat) * jax.nn.sigmoid(m_hat)
    y_ref = x @ w_ref.T
    assert y.shape == (batch, out_dim)
    assert jnp.allclose(y, y_ref, atol=1e-4, rtol=1e-4)

    print("KERNEL_OK")
</pallas_src>

<mosaic_0001>
module attributes {stable_mosaic.version = 11 : i64} {
  func.func @_gate_kernel(%arg0: i32, %arg1: i32, %arg2: memref<128x128xf32, #tpu.memory_space<vmem>>, %arg3: memref<128x128xf32, #tpu.memory_space<vmem>>, %arg4: memref<128x128xf32, #tpu.memory_space<vmem>>) attributes {dimension_semantics = [#tpu.dimension_semantics<parallel>, #tpu.dimension_semantics<parallel>], iteration_bounds = array<i64: 1, 1>, scalar_prefetch = 0 : i64, scratch_operands = 0 : i64, tpu.core_type = #tpu.core_type<tc>, window_params = [{transform_indices = @transform_0, window_bounds = array<i64: 128, 128>}, {transform_indices = @transform_1, window_bounds = array<i64: 128, 128>}, {transform_indices = @transform_2, window_bounds = array<i64: 128, 128>}]} {
    %c0 = arith.constant 0 : index
    %c0_0 = arith.constant 0 : index
    %0 = vector.load %arg2[%c0, %c0_0] : memref<128x128xf32, #tpu.memory_space<vmem>>, vector<128x128xf32>
    %1 = math.tanh %0 : vector<128x128xf32>
    %c0_1 = arith.constant 0 : index
    %c0_2 = arith.constant 0 : index
    %2 = vector.load %arg3[%c0_1, %c0_2] : memref<128x128xf32, #tpu.memory_space<vmem>>, vector<128x128xf32>
    %3 = arith.negf %2 : vector<128x128xf32>
    %4 = math.exp %3 : vector<128x128xf32>
    %cst = arith.constant 1.000000e+00 : f32
    %5 = vector.broadcast %cst : f32 to vector<128x128xf32>
    %6 = arith.addf %5, %4 : vector<128x128xf32>
    %7 = arith.divf %5, %6 : vector<128x128xf32>
    %8 = arith.mulf %1, %7 : vector<128x128xf32>
    %c0_3 = arith.constant 0 : index
    %c0_4 = arith.constant 0 : index
    %9 = vector.load %arg4[%c0_3, %c0_4] : memref<128x128xf32, #tpu.memory_space<vmem>>, vector<128x128xf32>
    tpu.vector_store %arg4[%c0_3, %c0_4], %8 {strides = array<i32>} : memref<128x128xf32, #tpu.memory_space<vmem>>, vector<128x128xf32>,
    return
  }
  func.func @transform_0(%arg0: i32, %arg1: i32) -> (i32, i32) {
    %c0_i32 = arith.constant 0 : i32
    return %arg0, %arg1 : i32, i32
  }
  func.func @transform_1(%arg0: i32, %arg1: i32) -> (i32, i32) {
    %c0_i32 = arith.constant 0 : i32
    return %arg0, %arg1 : i32, i32
  }
  func.func @transform_2(%arg0: i32, %arg1: i32) -> (i32, i32) {
    %c0_i32 = arith.constant 0 : i32
    return %arg0, %arg1 : i32, i32
  }
}

</mosaic_0001>

<llo_original>
// kernel: tpu_custom_call.1
$region0: #{tpu_custom_call.1}
  #allocation0 [shape = 'u32[]', space=smem, size = 0x4, offset = 0x4, fixed_abs, tag = 'smem constant byte address 0x4 - core index']
  #allocation1 [shape = 'u32[144,128]{1,0:T(1,128)}', space=vmem, size = 0x12000, scoped, tag = 'internal scratch']
  %s0 = inlined_call_operand.hbm [shape: f32[128,128], index: 0, kind: input, shape index: {}]
  %s1 = inlined_call_operand.hbm [shape: f32[128,128], index: 1, kind: input, shape index: {}]
  %s2 = inlined_call_operand.hbm [shape: f32[128,128], index: 2, kind: output, shape index: {}]
  %s3 = sld [smem:[#allocation0]]
  $region26: #{tpu_custom_call.1} parent=0
    _
  %s5 = ssub.s32 1, %s3
  %s6 = scalar_select 0, %s5, %s3
  $region1: #{tpu_custom_call.1} parent=0
    #allocation2 [shape = 'u8[65536]{0}', space=vmem, size = 0x10000, scoped, tag = 'input window, operand 0, single buffered']
    #allocation3 [shape = 's32[1]{0}', space=sflag, size = 0x4, scoped, tag = 'scoped memory for tpu_custom_call.1']
    #allocation4 [shape = 's32[1]{0}', space=sflag, size = 0x4, scoped, tag = 'scoped memory for tpu_custom_call.1']
    #allocation5 [shape = 'u8[65536]{0}', space=vmem, size = 0x10000, scoped, tag = 'input window, operand 1, single buffered']
    #allocation6 [shape = 's32[1]{0}', space=sflag, size = 0x4, scoped, tag = 'scoped memory for tpu_custom_call.1']
    #allocation7 [shape = 'u8[65536]{0}', space=vmem, size = 0x10000, scoped, tag = 'output window, operand 0, single buffered']
    %7 = vsyncpa [#allocation3], 0
    %8 = vsyncpa [#allocation6], 0
    %9 = vsyncpa [#allocation4], 0
    // Predicated region
    $region2: #{tpu_custom_call.1} parent=1 // pred_check
      _
    $region3: #{tpu_custom_call.1} parent=1 // pred_check_branch
      %11 = sbr.rel (0) target = $region5
    $region4: #{tpu_custom_call.1} parent=1 // pred_region
      %s13 = ssub.s32 2048, 2048
      %14 = vsyncadd [#allocation3], %s13
      %s15 = sshll.u32 [#allocation2], 4
      %s16 = int_to_ptr.vmem [resolvable:$true] %s15
      %21 = dma.hbm_to_vmem [thread:$0]  %s0, 2048, %s16, [#allocation3], 128, 128, 8
    $region5: #{tpu_custom_call.1} parent=1 // pred_fallthru
      _
    // Predicated region
    $region6: #{tpu_custom_call.1} parent=1 // pred_check
      _
    $region7: #{tpu_custom_call.1} parent=1 // pred_check_branch
      %23 = sbr.rel (0) target = $region9
    $region8: #{tpu_custom_call.1} parent=1 // pred_region
      %s25 = ssub.s32 2048, 2048
      %26 = vsyncadd [#allocation6], %s25
      %s27 = sshll.u32 [#allocation5], 4
      %s28 = int_to_ptr.vmem [resolvable:$true] %s27
      %33 = dma.hbm_to_vmem [thread:$0]  %s1, 2048, %s28, [#allocation6], 128, 128, 8
    $region9: #{tpu_custom_call.1} parent=1 // pred_fallthru
      _
    // Predicated region
    $region10: #{tpu_custom_call.1} parent=1 // pred_check
      _
    $region11: #{tpu_custom_call.1} parent=1 // pred_check_branch
      %35 = sbr.rel (0) target = $region13
    $region12: #{tpu_custom_call.1} parent=1 // pred_region
      %36 = dma.done [#allocation3], 2048
    $region13: #{tpu_custom_call.1} parent=1 // pred_fallthru
      _
    // Predicated region
    $region14: #{tpu_custom_call.1} parent=1 // pred_check
      _
    $region15: #{tpu_custom_call.1} parent=1 // pred_check_branch
      %38 = sbr.rel (0) target = $region17
    $region16: #{tpu_custom_call.1} parent=1 // pred_region
      %39 = dma.done [#allocation6], 2048
    $region17: #{tpu_custom_call.1} parent=1 // pred_fallthru
      _
    %v40 = vld [vmem:[#allocation2] sm:$0xff]
    %v41 = vld [vmem:[#allocation2 + $0x8] sm:$0xff]
    %v42 = vld [vmem:[#allocation2 + $0x10] sm:$0xff]
    %v43 = vld [vmem:[#allocation2 + $0x18] sm:$0xff]
    %v44 = vld [vmem:[#allocation2 + $0x20] sm:$0xff]
    %v45 = vld [vmem:[#allocation2 + $0x28] sm:$0xff]
    %v46 = vld [vmem:[#allocation2 + $0x30] sm:$0xff]
    %v47 = vld [vmem:[#allocation2 + $0x38] sm:$0xff]
    %v48 = vld [vmem:[#allocation2 + $0x40] sm:$0xff]
    %v49 = vld [vmem:[#allocation2 + $0x48] sm:$0xff]
    %v50 = vld [vmem:[#allocation2 + $0x50] sm:$0xff]
    %v51 = vld [vmem:[#allocation2 + $0x58] sm:$0xff]
    %v52 = vld [vmem:[#allocation2 + $0x60] sm:$0xff]
    %v53 = vld [vmem:[#allocation2 + $0x68] sm:$0xff]
    %v54 = vld [vmem:[#allocation2 + $0x70] sm:$0xff]
    %v55 = vld [vmem:[#allocation2 + $0x78] sm:$0xff]
    %v56 = vtanh.pop %v40
    %v57 = vtanh.pop %v41
    %v58 = vtanh.pop %v42
    %v59 = vtanh.pop %v43
    %v60 = vtanh.pop %v44
    %v61 = vtanh.pop %v45
    %v62 = vtanh.pop %v46
    %v63 = vtanh.pop %v47
    %v64 = vtanh.pop %v48
    %v65 = vtanh.pop %v49
    %v66 = vtanh.pop %v50
    %v67 = vtanh.pop %v51
    %v68 = vtanh.pop %v52
    %v69 = vtanh.pop %v53
    %v70 = vtanh.pop %v54
    %v71 = vtanh.pop %v55
    %v72 = vld [vmem:[#allocation5] sm:$0xff]
    %v73 = vld [vmem:[#allocation5 + $0x8] sm:$0xff]
    %v74 = vld [vmem:[#allocation5 + $0x10] sm:$0xff]
    %v75 = vld [vmem:[#allocation5 + $0x18] sm:$0xff]
    %v76 = vld [vmem:[#allocation5 + $0x20] sm:$0xff]
    %v77 = vld [vmem:[#allocation5 + $0x28] sm:$0xff]
    %v78 = vld [vmem:[#allocation5 + $0x30] sm:$0xff]
    %v79 = vld [vmem:[#allocation5 + $0x38] sm:$0xff]
    %v80 = vld [vmem:[#allocation5 + $0x40] sm:$0xff]
    %v81 = vld [vmem:[#allocation5 + $0x48] sm:$0xff]
    %v82 = vld [vmem:[#allocation5 + $0x50] sm:$0xff]
    %v83 = vld [vmem:[#allocation5 + $0x58] sm:$0xff]
    %v84 = vld [vmem:[#allocation5 + $0x60] sm:$0xff]
    %v85 = vld [vmem:[#allocation5 + $0x68] sm:$0xff]
    %v86 = vld [vmem:[#allocation5 + $0x70] sm:$0xff]
    %v87 = vld [vmem:[#allocation5 + $0x78] sm:$0xff]
    %v88 = vxor.u32 %v72, 2147483648
    %v89 = vxor.u32 %v73, 2147483648
    %v90 = vxor.u32 %v74, 2147483648
    %v91 = vxor.u32 %v75, 2147483648
    %v92 = vxor.u32 %v76, 2147483648
    %v93 = vxor.u32 %v77, 2147483648
    %v94 = vxor.u32 %v78, 2147483648
    %v95 = vxor.u32 %v79, 2147483648
    %v96 = vxor.u32 %v80, 2147483648
    %v97 = vxor.u32 %v81, 2147483648
    %v98 = vxor.u32 %v82, 2147483648
    %v99 = vxor.u32 %v83, 2147483648
    %v100 = vxor.u32 %v84, 2147483648
    %v101 = vxor.u32 %v85, 2147483648
    %v102 = vxor.u32 %v86, 2147483648
    %v103 = vxor.u32 %v87, 2147483648
    %v104 = vmul.f32 %v88, 1.442695
    %v105 = vpow.pop %v104
    %v106 = vmul.f32 %v89, 1.442695
    %v107 = vpow.pop %v106
    %v108 = vmul.f32 %v90, 1.442695
    %v109 = vpow.pop %v108
    %v110 = vmul.f32 %v91, 1.442695
    %v111 = vpow.pop %v110
    %v112 = vmul.f32 %v92, 1.442695
    %v113 = vpow.pop %v112
    %v114 = vmul.f32 %v93, 1.442695
    %v115 = vpow.pop %v114
    %v116 = vmul.f32 %v94, 1.442695
    %v117 = vpow.pop %v116
    %v118 = vmul.f32 %v95, 1.442695
    %v119 = vpow.pop %v118
    %v120 = vmul.f32 %v96, 1.442695
    %v121 = vpow.pop %v120
    %v122 = vmul.f32 %v97, 1.442695
    %v123 = vpow.pop %v122
    %v124 = vmul.f32 %v98, 1.442695
    %v125 = vpow.pop %v124
    %v126 = vmul.f32 %v99, 1.442695
    %v127 = vpow.pop %v126
    %v128 = vmul.f32 %v100, 1.442695
    %v129 = vpow.pop %v128
    %v130 = vmul.f32 %v101, 1.442695
    %v131 = vpow.pop %v130
    %v132 = vmul.f32 %v102, 1.442695
    %v133 = vpow.pop %v132
    %v134 = vmul.f32 %v103, 1.442695
    %v135 = vpow.pop %v134
    %v136 = vadd.f32 %v105, 1.0
    %v137 = vadd.f32 %v107, 1.0
    %v138 = vadd.f32 %v109, 1.0
    %v139 = vadd.f32 %v111, 1.0
    %v140 = vadd.f32 %v113, 1.0
    %v141 = vadd.f32 %v115, 1.0
    %v142 = vadd.f32 %v117, 1.0
    %v143 = vadd.f32 %v119, 1.0
    %v144 = vadd.f32 %v121, 1.0
    %v145 = vadd.f32 %v123, 1.0
    %v146 = vadd.f32 %v125, 1.0
    %v147 = vadd.f32 %v127, 1.0
    %v148 = vadd.f32 %v129, 1.0
    %v149 = vadd.f32 %v131, 1.0
    %v150 = vadd.f32 %v133, 1.0
    %v151 = vadd.f32 %v135, 1.0
    %v152 = vrcp.pop %v136
    %v153 = vmul.f32 1.0, %v152
    %v154 = vrcp.pop %v137
    %v155 = vmul.f32 1.0, %v154
    %v156 = vrcp.pop %v138
    %v157 = vmul.f32 1.0, %v156
    %v158 = vrcp.pop %v139
    %v159 = vmul.f32 1.0, %v158
    %v160 = vrcp.pop %v140
    %v161 = vmul.f32 1.0, %v160
    %v162 = vrcp.pop %v141
    %v163 = vmul.f32 1.0, %v162
    %v164 = vrcp.pop %v142
    %v165 = vmul.f32 1.0, %v164
    %v166 = vrcp.pop %v143
    %v167 = vmul.f32 1.0, %v166
    %v168 = vrcp.pop %v144
    %v169 = vmul.f32 1.0, %v168
    %v170 = vrcp.pop %v145
    %v171 = vmul.f32 1.0, %v170
    %v172 = vrcp.pop %v146
    %v173 = vmul.f32 1.0, %v172
    %v174 = vrcp.pop %v147
    %v175 = vmul.f32 1.0, %v174
    %v176 = vrcp.pop %v148
    %v177 = vmul.f32 1.0, %v176
    %v178 = vrcp.pop %v149
    %v179 = vmul.f32 1.0, %v178
    %v180 = vrcp.pop %v150
    %v181 = vmul.f32 1.0, %v180
    %v182 = vrcp.pop %v151
    %v183 = vmul.f32 1.0, %v182
    %v184 = vmul.f32 %v56, %v153
    %v185 = vmul.f32 %v57, %v155
    %v186 = vmul.f32 %v58, %v157
    %v187 = vmul.f32 %v59, %v159
    %v188 = vmul.f32 %v60, %v161
    %v189 = vmul.f32 %v61, %v163
    %v190 = vmul.f32 %v62, %v165
    %v191 = vmul.f32 %v63, %v167
    %v192 = vmul.f32 %v64, %v169
    %v193 = vmul.f32 %v65, %v171
    %v194 = vmul.f32 %v66, %v173
    %v195 = vmul.f32 %v67, %v175
    %v196 = vmul.f32 %v68, %v177
    %v197 = vmul.f32 %v69, %v179
    %v198 = vmul.f32 %v70, %v181
    %v199 = vmul.f32 %v71, %v183
    %200 = vst [vmem:[#allocation7] sm:$0xff] %v184
    %201 = vst [vmem:[#allocation7 + $0x8] sm:$0xff] %v185
    %202 = vst [vmem:[#allocation7 + $0x10] sm:$0xff] %v186
    %203 = vst [vmem:[#allocation7 + $0x18] sm:$0xff] %v187
    %204 = vst [vmem:[#allocation7 + $0x20] sm:$0xff] %v188
    %205 = vst [vmem:[#allocation7 + $0x28] sm:$0xff] %v189
    %206 = vst [vmem:[#allocation7 + $0x30] sm:$0xff] %v190
    %207 = vst [vmem:[#allocation7 + $0x38] sm:$0xff] %v191
    %208 = vst [vmem:[#allocation7 + $0x40] sm:$0xff] %v192
    %209 = vst [vmem:[#allocation7 + $0x48] sm:$0xff] %v193
    %210 = vst [vmem:[#allocation7 + $0x50] sm:$0xff] %v194
    %211 = vst [vmem:[#allocation7 + $0x58] sm:$0xff] %v195
    %212 = vst [vmem:[#allocation7 + $0x60] sm:$0xff] %v196
    %213 = vst [vmem:[#allocation7 + $0x68] sm:$0xff] %v197
    %214 = vst [vmem:[#allocation7 + $0x70] sm:$0xff] %v198
    %215 = vst [vmem:[#allocation7 + $0x78] sm:$0xff] %v199
    // Predicated region
    $region18: #{tpu_custom_call.1} parent=1 // pred_check
      _
    $region19: #{tpu_custom_call.1} parent=1 // pred_check_branch
      %217 = sbr.rel (0) target = $region21
    $region20: #{tpu_custom_call.1} parent=1 // pred_region
      %s219 = ssub.s32 2048, 2048
      %220 = vsyncadd [#allocation4], %s219
      %s221 = sshll.u32 [#allocation7], 4
      %s222 = int_to_ptr.vmem [resolvable:$true] %s221
      %227 = dma.vmem_to_hbm [thread:$0]  %s222, 2048, %s2, [#allocation4], 128, 128, 8
    $region21: #{tpu_custom_call.1} parent=1 // pred_fallthru
      _
    // Predicated region
    $region22: #{tpu_custom_call.1} parent=1 // pred_check
      _
    $region23: #{tpu_custom_call.1} parent=1 // pred_check_branch
      %229 = sbr.rel (0) target = $region25
    $region24: #{tpu_custom_call.1} parent=1 // pred_region
      %230 = dma.done [#allocation4], 2048
    $region25: #{tpu_custom_call.1} parent=1 // pred_fallthru
      _
    %231 = vsyncpa [#allocation3], 1
    %232 = vsyncpa [#allocation6], 1
    %233 = vsyncpa [#allocation4], 1

</llo_original>
